<compile_context>
chip_gen: v5e
topology: v5e:2x2
jax: 0.10.0
libtpu: 0.0.40
codegen_flags: <defaults>
</compile_context>

<pallas_src>
import functools

import numpy as np
import jax
import jax.numpy as jnp
from jax.experimental import pallas as pl
from jax.experimental.pallas import tpu as pltpu


# --------------------------------------------------------------------------- #
# Shared helper
# --------------------------------------------------------------------------- #
def _split_weights(x, thr, gating_param, eps):
    z = gating_param * (x - thr)
    return jnp.clip(1.0 / (1.0 + jnp.exp(-z)), eps, 1.0 - eps)


# --------------------------------------------------------------------------- #
# Pass 1: reduction kernels (accumulator resident across the grid)
# --------------------------------------------------------------------------- #
def _cls_reduce_kernel(thr_ref, x_ref, t_ref, w_ref, acc_ref, *,
                       gating_param, eps, n_classes):
    """acc_ref first-axis layout:
         [0 : n_classes]             sum lw * (t == k)   (left numerators)
         [n_classes : 2*n_classes]   sum  w * (t == k)
         [2*n_classes]               sum lw
         [2*n_classes + 1]           sum  w
       Right-branch sums are derived as (w-sum - lw-sum), i.e. rw = w - lw,
       so no rw vector is ever built.
    """
    @pl.when(pl.program_id(0) == 0)
    def _():
        acc_ref[...] = jnp.zeros_like(acc_ref)

    x = x_ref[...]
    t = t_ref[...]
    w = w_ref[...]
    sw = _split_weights(x, thr_ref[0], gating_param, eps)
    lw = w * sw

    acc_ref[2 * n_classes] += lw
    acc_ref[2 * n_classes + 1] += w
    for k in range(n_classes):                 # n_classes is small & static
        m = (t == k).astype(jnp.float32)
        acc_ref[k] += lw * m
        acc_ref[n_classes + k] += w * m


def _reg_reduce_kernel(thr_ref, x_ref, t_ref, w_ref, acc_ref, *,
                       gating_param, eps):
    """acc_ref first-axis layout: [0] sum lw*t, [1] sum w*t, [2] sum lw."""
    @pl.when(pl.program_id(0) == 0)
    def _():
        acc_ref[...] = jnp.zeros_like(acc_ref)

    x = x_ref[...]
    t = t_ref[...]
    w = w_ref[...]
    sw = _split_weights(x, thr_ref[0], gating_param, eps)
    lw = w * sw

    acc_ref[0] += lw * t
    acc_ref[1] += w * t
    acc_ref[2] += lw


# --------------------------------------------------------------------------- #
# Pass 2: broadcast kernels (pure elementwise, "parallel" grid)
# --------------------------------------------------------------------------- #
def _cls_broadcast_kernel(thr_ref, lr_ref, x_ref, out_ref, *,
                          gating_param, eps, n_classes):
    """out_ref: (n_classes, block_rows, 128); lr_ref (SMEM): left ++ right."""
    sw = _split_weights(x_ref[...], thr_ref[0], gating_param, eps)
    om = 1.0 - sw
    for k in range(n_classes):
        # Full (block_rows, 128) unmasked store per class.
        out_ref[k] = sw * lr_ref[k] + om * lr_ref[n_classes + k]


def _reg_broadcast_kernel(thr_ref, lr_ref, x_ref, out_ref, *,
                          gating_param, eps):
    sw = _split_weights(x_ref[...], thr_ref[0], gating_param, eps)
    out_ref[...] = sw * lr_ref[0] + (1.0 - sw) * lr_ref[1]


# --------------------------------------------------------------------------- #
# Wrapper
# --------------------------------------------------------------------------- #
def _choose_block_rows(n):
    # Largest tile (block_rows * 128 samples) that still leaves >= 2 grid
    # steps; keeps per-call VMEM footprint small even on v7x (64 MiB VMEM).
    for br in (256, 128, 64, 32, 16):
        if n >= br * 128 * 2:
            return br
    return 8


def soft_splitter_forward(inputs, targets, sample_weights, *, split_feature,
                          split_threshold, gating_param, is_classifier,
                          eps=1e-3, n_classes=None):
    """Pallas implementation of SoftSplitter.forward.

    inputs: (N, F) f32, targets: (N,), sample_weights: (N,) f32.
    Returns (N, n_classes) for the classifier branch, (N,) otherwise.
    """
    N = inputs.shape[0]
    x = inputs[:, split_feature].astype(jnp.float32)
    w = sample_weights.astype(jnp.float32)

    block_rows = _choose_block_rows(N)
    tile = block_rows * 128
    num_tiles = -(-N // tile)
    Np = num_tiles * tile
    R = Np // 128
    pad = Np - N

    # Pad with sample_weight = 0 so all global sums are unchanged.
    x_p = jnp.pad(x, (0, pad)).reshape(R, 128)
    w_p = jnp.pad(w, (0, pad)).reshape(R, 128)
    thr = jnp.asarray([split_threshold], dtype=jnp.float32)

    smem_spec = pl.BlockSpec(memory_space=pltpu.MemorySpace.SMEM)
    tile_spec = pl.BlockSpec((block_rows, 128), lambda i: (i, 0))
    reduce_params = pltpu.CompilerParams(dimension_semantics=("arbitrary",))
    bcast_params = pltpu.CompilerParams(dimension_semantics=("parallel",))

    if is_classifier:
        assert n_classes is not None
        t_p = jnp.pad(targets.astype(jnp.int32), (0, pad)).reshape(R, 128)
        n_stats = 2 * n_classes + 2

        acc = pl.pallas_call(
            functools.partial(_cls_reduce_kernel, gating_param=gating_param,
                              eps=eps, n_classes=n_classes),
            out_shape=jax.ShapeDtypeStruct((n_stats, block_rows, 128),
                                           jnp.float32),
            grid=(num_tiles,),
            in_specs=[smem_spec, tile_spec, tile_spec, tile_spec],
            out_specs=pl.BlockSpec((n_stats, block_rows, 128),
                                   lambda i: (0, 0, 0)),
            compiler_params=reduce_params,
        )(thr, x_p, t_p, w_p)

        stats = jnp.sum(acc, axis=(1, 2))                  # (n_stats,) scalars
        num_l = stats[:n_classes]
        num_w = stats[n_classes:2 * n_classes]
        sum_lw = stats[2 * n_classes]
        sum_w = stats[2 * n_classes + 1]
        left = num_l / sum_lw
        right = (num_w - num_l) / (sum_w - sum_lw)         # rw = w - lw
        lr = jnp.concatenate([left, right]).astype(jnp.float32)

        out = pl.pallas_call(
            functools.partial(_cls_broadcast_kernel, gating_param=gating_param,
                              eps=eps, n_classes=n_classes),
            out_shape=jax.ShapeDtypeStruct((n_classes, R, 128), jnp.float32),
            grid=(num_tiles,),
            in_specs=[smem_spec, smem_spec, tile_spec],
            out_specs=pl.BlockSpec((n_classes, block_rows, 128),
                                   lambda i: (0, i, 0)),
            compiler_params=bcast_params,
        )(thr, lr, x_p)
        return out.reshape(n_classes, Np).T[:N]            # (N, n_classes)
    else:
        t_p = jnp.pad(targets.astype(jnp.float32), (0, pad)).reshape(R, 128)

        acc = pl.pallas_call(
            functools.partial(_reg_reduce_kernel, gating_param=gating_param,
                              eps=eps),
            out_shape=jax.ShapeDtypeStruct((3, block_rows, 128), jnp.float32),
            grid=(num_tiles,),
            in_specs=[smem_spec, tile_spec, tile_spec, tile_spec],
            out_specs=pl.BlockSpec((3, block_rows, 128), lambda i: (0, 0, 0)),
            compiler_params=reduce_params,
        )(thr, x_p, t_p, w_p)

        stats = jnp.sum(acc, axis=(1, 2))                  # (3,)
        sum_lw = stats[2]
        left = stats[0] / sum_lw
        # NOTE: reference PyTorch code divides the *right* numerator by
        # left_weights.sum() as well -- reproduced exactly.
        right = (stats[1] - stats[0]) / sum_lw
        lr = jnp.stack([left, right]).astype(jnp.float32)

        out = pl.pallas_call(
            functools.partial(_reg_broadcast_kernel, gating_param=gating_param,
                              eps=eps),
            out_shape=jax.ShapeDtypeStruct((R, 128), jnp.float32),
            grid=(num_tiles,),
            in_specs=[smem_spec, smem_spec, tile_spec],
            out_specs=tile_spec,
            compiler_params=bcast_params,
        )(thr, lr, x_p)
        return out.reshape(Np)[:N]


# --------------------------------------------------------------------------- #
# Pure-JAX reference for verification
# --------------------------------------------------------------------------- #
def _reference(inputs, targets, sample_weights, *, split_feature,
               split_threshold, gating_param, is_classifier, eps, n_classes):
    x = inputs[:, split_feature]
    sw = jnp.clip(1.0 / (1.0 + jnp.exp(-gating_param * (x - split_threshold))),
                  eps, 1.0 - eps)
    lw = sample_weights * sw
    rw = sample_weights * (1.0 - sw)
    if is_classifier:
        left = jnp.stack([jnp.sum(lw * (targets == k)) for k in range(n_classes)])
        right = jnp.stack([jnp.sum(rw * (targets == k)) for k in range(n_classes)])
        left = left / jnp.sum(lw)
        right = right / jnp.sum(rw)
        return sw[:, None] * left + (1.0 - sw)[:, None] * right
    else:
        left = jnp.sum(lw * targets) / jnp.sum(lw)
        right = jnp.sum(rw * targets) / jnp.sum(lw)   # reproduce reference bug
        return sw * left + (1.0 - sw) * right


# --------------------------------------------------------------------------- #
# Demo
# --------------------------------------------------------------------------- #
if __name__ == "__main__":
    key = jax.random.PRNGKey(0)
    k1, k2, k3, k4 = jax.random.split(key, 4)

    N, F = 128, 8
    gating_param = 2.5
    eps = 1e-3
    split_feature = 2
    split_threshold = 0.1

    inputs = jax.random.normal(k1, (N, F), dtype=jnp.float32)
    class_targets = jax.random.randint(k2, (N,), 0, 3, dtype=jnp.int32)
    reg_targets = jax.random.normal(k3, (N,), dtype=jnp.float32)
    sample_weights = jax.random.uniform(k4, (N,), dtype=jnp.float32) + 0.1

    # TODO(synk): torch.unique(targets) is data-dependent; n_classes is computed
    # host-side (static) since Pallas needs static shapes/loop bounds.
    n_classes = int(np.unique(np.asarray(class_targets)).shape[0])

    # --- classifier path ---
    out_cls = soft_splitter_forward(
        inputs, class_targets, sample_weights,
        split_feature=split_feature, split_threshold=split_threshold,
        gating_param=gating_param, is_classifier=True, eps=eps,
        n_classes=n_classes)
    jax.block_until_ready(out_cls)
    ref_cls = _reference(
        inputs, class_targets, sample_weights,
        split_feature=split_feature, split_threshold=split_threshold,
        gating_param=gating_param, is_classifier=True, eps=eps,
        n_classes=n_classes)
    np.testing.assert_allclose(np.asarray(out_cls), np.asarray(ref_cls),
                               rtol=1e-5, atol=1e-5)

    # --- regressor path ---
    out_reg = soft_splitter_forward(
        inputs, reg_targets, sample_weights,
        split_feature=split_feature, split_threshold=split_threshold,
        gating_param=gating_param, is_classifier=False, eps=eps)
    jax.block_until_ready(out_reg)
    ref_reg = _reference(
        inputs, reg_targets, sample_weights,
        split_feature=split_feature, split_threshold=split_threshold,
        gating_param=gating_param, is_classifier=False, eps=eps,
        n_classes=None)
    np.testing.assert_allclose(np.asarray(out_reg), np.asarray(ref_reg),
                               rtol=1e-5, atol=1e-5)

    print("KERNEL_OK")
</pallas_src>

<mosaic_0001>
module attributes {stable_mosaic.version = 11 : i64} {
  func.func @_cls_reduce_kernel(%arg0: i32, %arg1: memref<1xf32, #tpu.memory_space<smem>>, %arg2: memref<8x128xf32, #tpu.memory_space<vmem>>, %arg3: memref<8x128xi32, #tpu.memory_space<vmem>>, %arg4: memref<8x128xf32, #tpu.memory_space<vmem>>, %arg5: memref<8x8x128xf32, #tpu.memory_space<vmem>>) attributes {dimension_semantics = [#tpu.dimension_semantics<arbitrary>], iteration_bounds = array<i64: 1>, scalar_prefetch = 0 : i64, scratch_operands = 0 : i64, tpu.core_type = #tpu.core_type<tc>, window_params = [{transform_indices = @transform_0, window_bounds = array<i64: 1>}, {transform_indices = @transform_1, window_bounds = array<i64: 8, 128>}, {transform_indices = @transform_2, window_bounds = array<i64: 8, 128>}, {transform_indices = @transform_3, window_bounds = array<i64: 8, 128>}, {pipeline_mode = #tpu.pipeline_mode<synchronous>, transform_indices = @transform_4, window_bounds = array<i64: 8, 8, 128>}]} {
    %c0_i32 = arith.constant 0 : i32
    %0 = arith.cmpi eq, %arg0, %c0_i32 : i32
    %1 = arith.extui %0 : i1 to i32
    %c0_i32_0 = arith.constant 0 : i32
    %2 = arith.cmpi ne, %1, %c0_i32_0 : i32
    scf.if %2 {
      %cst_54 = arith.constant 0.000000e+00 : f32
      %89 = vector.broadcast %cst_54 : f32 to vector<8x8x128xf32>
      %c0_55 = arith.constant 0 : index
      %c0_56 = arith.constant 0 : index
      %c0_57 = arith.constant 0 : index
      %90 = vector.load %arg5[%c0_55, %c0_56, %c0_57] : memref<8x8x128xf32, #tpu.memory_space<vmem>>, vector<8x8x128xf32>
      tpu.vector_store %arg5[%c0_55, %c0_56, %c0_57], %89 {strides = array<i32>} : memref<8x8x128xf32, #tpu.memory_space<vmem>>, vector<8x8x128xf32>,
    } else {
    }
    %c0 = arith.constant 0 : index
    %c0_1 = arith.constant 0 : index
    %3 = vector.load %arg2[%c0, %c0_1] : memref<8x128xf32, #tpu.memory_space<vmem>>, vector<8x128xf32>
    %c0_2 = arith.constant 0 : index
    %c0_3 = arith.constant 0 : index
    %4 = vector.load %arg3[%c0_2, %c0_3] : memref<8x128xi32, #tpu.memory_space<vmem>>, vector<8x128xi32>
    %c0_4 = arith.constant 0 : index
    %c0_5 = arith.constant 0 : index
    %5 = vector.load %arg4[%c0_4, %c0_5] : memref<8x128xf32, #tpu.memory_space<vmem>>, vector<8x128xf32>
    %c0_6 = arith.constant 0 : index
    %6 = memref.load %arg1[%c0_6] : memref<1xf32, #tpu.memory_space<smem>>
    %7 = vector.broadcast %6 : f32 to vector<8x128xf32>
    %8 = arith.subf %3, %7 : vector<8x128xf32>
    %cst = arith.constant 2.500000e+00 : f32
    %9 = vector.broadcast %cst : f32 to vector<8x128xf32>
    %10 = arith.mulf %9, %8 : vector<8x128xf32>
    %cst_7 = arith.constant 0.000000e+00 : f32
    %11 = vector.broadcast %cst_7 : f32 to vector<8x128xf32>
    %12 = arith.subf %11, %10 : vector<8x128xf32>
    %13 = math.exp %12 : vector<8x128xf32>
    %cst_8 = arith.constant 1.000000e+00 : f32
    %14 = vector.broadcast %cst_8 : f32 to vector<8x128xf32>
    %15 = arith.addf %14, %13 : vector<8x128xf32>
    %cst_9 = arith.constant 1.000000e+00 : f32
    %16 = vector.broadcast %cst_9 : f32 to vector<8x128xf32>
    %17 = arith.divf %16, %15 : vector<8x128xf32>
    %cst_10 = arith.constant 1.000000e-03 : f32
    %cst_11 = arith.constant 9.990000e-01 : f32
    %18 = vector.broadcast %cst_10 : f32 to vector<8x128xf32>
    %19 = arith.maximumf %18, %17 : vector<8x128xf32>
    %20 = vector.broadcast %cst_11 : f32 to vector<8x128xf32>
    %21 = arith.minimumf %20, %19 : vector<8x128xf32>
    %22 = arith.mulf %5, %21 : vector<8x128xf32>
    %c6 = arith.constant 6 : index
    %c0_12 = arith.constant 0 : index
    %c0_13 = arith.constant 0 : index
    %23 = vector.load %arg5[%c6, %c0_12, %c0_13] : memref<8x8x128xf32, #tpu.memory_space<vmem>>, vector<1x8x128xf32>
    %24 = vector.shape_cast %23 : vector<1x8x128xf32> to vector<8x128xf32>
    %25 = arith.addf %24, %22 : vector<8x128xf32>
    %c6_14 = arith.constant 6 : index
    %c0_15 = arith.constant 0 : index
    %c0_16 = arith.constant 0 : index
    %26 = vector.load %arg5[%c6_14, %c0_15, %c0_16] : memref<8x8x128xf32, #tpu.memory_space<vmem>>, vector<1x8x128xf32>
    %27 = vector.shape_cast %26 : vector<1x8x128xf32> to vector<8x128xf32>
    %28 = vector.shape_cast %25 : vector<8x128xf32> to vector<1x8x128xf32>
    tpu.vector_store %arg5[%c6_14, %c0_15, %c0_16], %28 {strides = array<i32>} : memref<8x8x128xf32, #tpu.memory_space<vmem>>, vector<1x8x128xf32>,
    %c7 = arith.constant 7 : index
    %c0_17 = arith.constant 0 : index
    %c0_18 = arith.constant 0 : index
    %29 = vector.load %arg5[%c7, %c0_17, %c0_18] : memref<8x8x128xf32, #tpu.memory_space<vmem>>, vector<1x8x128xf32>
    %30 = vector.shape_cast %29 : vector<1x8x128xf32> to vector<8x128xf32>
    %31 = arith.addf %30, %5 : vector<8x128xf32>
    %c7_19 = arith.constant 7 : index
    %c0_20 = arith.constant 0 : index
    %c0_21 = arith.constant 0 : index
    %32 = vector.load %arg5[%c7_19, %c0_20, %c0_21] : memref<8x8x128xf32, #tpu.memory_space<vmem>>, vector<1x8x128xf32>
    %33 = vector.shape_cast %32 : vector<1x8x128xf32> to vector<8x128xf32>
    %34 = vector.shape_cast %31 : vector<8x128xf32> to vector<1x8x128xf32>
    tpu.vector_store %arg5[%c7_19, %c0_20, %c0_21], %34 {strides = array<i32>} : memref<8x8x128xf32, #tpu.memory_space<vmem>>, vector<1x8x128xf32>,
    %c0_i32_22 = arith.constant 0 : i32
    %35 = vector.broadcast %c0_i32_22 : i32 to vector<8x128xi32>
    %36 = arith.cmpi eq, %4, %35 : vector<8x128xi32>
    %37 = arith.extui %36 : vector<8x128xi1> to vector<8x128xi32>
    %38 = arith.sitofp %37 : vector<8x128xi32> to vector<8x128xf32>
    %c0_23 = arith.constant 0 : index
    %c0_24 = arith.constant 0 : index
    %c0_25 = arith.constant 0 : index
    %39 = vector.load %arg5[%c0_23, %c0_24, %c0_25] : memref<8x8x128xf32, #tpu.memory_space<vmem>>, vector<1x8x128xf32>
    %40 = vector.shape_cast %39 : vector<1x8x128xf32> to vector<8x128xf32>
    %41 = arith.mulf %22, %38 : vector<8x128xf32>
    %42 = arith.addf %40, %41 : vector<8x128xf32>
    %c0_26 = arith.constant 0 : index
    %c0_27 = arith.constant 0 : index
    %c0_28 = arith.constant 0 : index
    %43 = vector.load %arg5[%c0_26, %c0_27, %c0_28] : memref<8x8x128xf32, #tpu.memory_space<vmem>>, vector<1x8x128xf32>
    %44 = vector.shape_cast %43 : vector<1x8x128xf32> to vector<8x128xf32>
    %45 = vector.shape_cast %42 : vector<8x128xf32> to vector<1x8x128xf32>
    tpu.vector_store %arg5[%c0_26, %c0_27, %c0_28], %45 {strides = array<i32>} : memref<8x8x128xf32, #tpu.memory_space<vmem>>, vector<1x8x128xf32>,
    %c3 = arith.constant 3 : index
    %c0_29 = arith.constant 0 : index
    %c0_30 = arith.constant 0 : index
    %46 = vector.load %arg5[%c3, %c0_29, %c0_30] : memref<8x8x128xf32, #tpu.memory_space<vmem>>, vector<1x8x128xf32>
    %47 = vector.shape_cast %46 : vector<1x8x128xf32> to vector<8x128xf32>
    %48 = arith.mulf %5, %38 : vector<8x128xf32>
    %49 = arith.addf %47, %48 : vector<8x128xf32>
    %c3_31 = arith.constant 3 : index
    %c0_32 = arith.constant 0 : index
    %c0_33 = arith.constant 0 : index
    %50 = vector.load %arg5[%c3_31, %c0_32, %c0_33] : memref<8x8x128xf32, #tpu.memory_space<vmem>>, vector<1x8x128xf32>
    %51 = vector.shape_cast %50 : vector<1x8x128xf32> to vector<8x128xf32>
    %52 = vector.shape_cast %49 : vector<8x128xf32> to vector<1x8x128xf32>
    tpu.vector_store %arg5[%c3_31, %c0_32, %c0_33], %52 {strides = array<i32>} : memref<8x8x128xf32, #tpu.memory_space<vmem>>, vector<1x8x128xf32>,
    %c1_i32 = arith.constant 1 : i32
    %53 = vector.broadcast %c1_i32 : i32 to vector<8x128xi32>
    %54 = arith.cmpi eq, %4, %53 : vector<8x128xi32>
    %55 = arith.extui %54 : vector<8x128xi1> to vector<8x128xi32>
    %56 = arith.sitofp %55 : vector<8x128xi32> to vector<8x128xf32>
    %c1 = arith.constant 1 : index
    %c0_34 = arith.constant 0 : index
    %c0_35 = arith.constant 0 : index
    %57 = vector.load %arg5[%c1, %c0_34, %c0_35] : memref<8x8x128xf32, #tpu.memory_space<vmem>>, vector<1x8x128xf32>
    %58 = vector.shape_cast %57 : vector<1x8x128xf32> to vector<8x128xf32>
    %59 = arith.mulf %22, %56 : vector<8x128xf32>
    %60 = arith.addf %58, %59 : vector<8x128xf32>
    %c1_36 = arith.constant 1 : index
    %c0_37 = arith.constant 0 : index
    %c0_38 = arith.constant 0 : index
    %61 = vector.load %arg5[%c1_36, %c0_37, %c0_38] : memref<8x8x128xf32, #tpu.memory_space<vmem>>, vector<1x8x128xf32>
    %62 = vector.shape_cast %61 : vector<1x8x128xf32> to vector<8x128xf32>
    %63 = vector.shape_cast %60 : vector<8x128xf32> to vector<1x8x128xf32>
    tpu.vector_store %arg5[%c1_36, %c0_37, %c0_38], %63 {strides = array<i32>} : memref<8x8x128xf32, #tpu.memory_space<vmem>>, vector<1x8x128xf32>,
    %c4 = arith.constant 4 : index
    %c0_39 = arith.constant 0 : index
    %c0_40 = arith.constant 0 : index
    %64 = vector.load %arg5[%c4, %c0_39, %c0_40] : memref<8x8x128xf32, #tpu.memory_space<vmem>>, vector<1x8x128xf32>
    %65 = vector.shape_cast %64 : vector<1x8x128xf32> to vector<8x128xf32>
    %66 = arith.mulf %5, %56 : vector<8x128xf32>
    %67 = arith.addf %65, %66 : vector<8x128xf32>
    %c4_41 = arith.constant 4 : index
    %c0_42 = arith.constant 0 : index
    %c0_43 = arith.constant 0 : index
    %68 = vector.load %arg5[%c4_41, %c0_42, %c0_43] : memref<8x8x128xf32, #tpu.memory_space<vmem>>, vector<1x8x128xf32>
    %69 = vector.shape_cast %68 : vector<1x8x128xf32> to vector<8x128xf32>
    %70 = vector.shape_cast %67 : vector<8x128xf32> to vector<1x8x128xf32>
    tpu.vector_store %arg5[%c4_41, %c0_42, %c0_43], %70 {strides = array<i32>} : memref<8x8x128xf32, #tpu.memory_space<vmem>>, vector<1x8x128xf32>,
    %c2_i32 = arith.constant 2 : i32
    %71 = vector.broadcast %c2_i32 : i32 to vector<8x128xi32>
    %72 = arith.cmpi eq, %4, %71 : vector<8x128xi32>
    %73 = arith.extui %72 : vector<8x128xi1> to vector<8x128xi32>
    %74 = arith.sitofp %73 : vector<8x128xi32> to vector<8x128xf32>
    %c2 = arith.constant 2 : index
    %c0_44 = arith.constant 0 : index
    %c0_45 = arith.constant 0 : index
    %75 = vector.load %arg5[%c2, %c0_44, %c0_45] : memref<8x8x128xf32, #tpu.memory_space<vmem>>, vector<1x8x128xf32>
    %76 = vector.shape_cast %75 : vector<1x8x128xf32> to vector<8x128xf32>
    %77 = arith.mulf %22, %74 : vector<8x128xf32>
    %78 = arith.addf %76, %77 : vector<8x128xf32>
    %c2_46 = arith.constant 2 : index
    %c0_47 = arith.constant 0 : index
    %c0_48 = arith.constant 0 : index
    %79 = vector.load %arg5[%c2_46, %c0_47, %c0_48] : memref<8x8x128xf32, #tpu.memory_space<vmem>>, vector<1x8x128xf32>
    %80 = vector.shape_cast %79 : vector<1x8x128xf32> to vector<8x128xf32>
    %81 = vector.shape_cast %78 : vector<8x128xf32> to vector<1x8x128xf32>
    tpu.vector_store %arg5[%c2_46, %c0_47, %c0_48], %81 {strides = array<i32>} : memref<8x8x128xf32, #tpu.memory_space<vmem>>, vector<1x8x128xf32>,
    %c5 = arith.constant 5 : index
    %c0_49 = arith.constant 0 : index
    %c0_50 = arith.constant 0 : index
    %82 = vector.load %arg5[%c5, %c0_49, %c0_50] : memref<8x8x128xf32, #tpu.memory_space<vmem>>, vector<1x8x128xf32>
    %83 = vector.shape_cast %82 : vector<1x8x128xf32> to vector<8x128xf32>
    %84 = arith.mulf %5, %74 : vector<8x128xf32>
    %85 = arith.addf %83, %84 : vector<8x128xf32>
    %c5_51 = arith.constant 5 : index
    %c0_52 = arith.constant 0 : index
    %c0_53 = arith.constant 0 : index
    %86 = vector.load %arg5[%c5_51, %c0_52, %c0_53] : memref<8x8x128xf32, #tpu.memory_space<vmem>>, vector<1x8x128xf32>
    %87 = vector.shape_cast %86 : vector<1x8x128xf32> to vector<8x128xf32>
    %88 = vector.shape_cast %85 : vector<8x128xf32> to vector<1x8x128xf32>
    tpu.vector_store %arg5[%c5_51, %c0_52, %c0_53], %88 {strides = array<i32>} : memref<8x8x128xf32, #tpu.memory_space<vmem>>, vector<1x8x128xf32>,
    return
  }
  func.func @transform_0(%arg0: i32) -> i32 {
    %c0_i32 = arith.constant 0 : i32
    %c0_i32_0 = arith.constant 0 : i32
    return %c0_i32 : i32
  }
  func.func @transform_1(%arg0: i32) -> (i32, i32) {
    %c0_i32 = arith.constant 0 : i32
    %c0_i32_0 = arith.constant 0 : i32
    return %arg0, %c0_i32 : i32, i32
  }
  func.func @transform_2(%arg0: i32) -> (i32, i32) {
    %c0_i32 = arith.constant 0 : i32
    %c0_i32_0 = arith.constant 0 : i32
    return %arg0, %c0_i32 : i32, i32
  }
  func.func @transform_3(%arg0: i32) -> (i32, i32) {
    %c0_i32 = arith.constant 0 : i32
    %c0_i32_0 = arith.constant 0 : i32
    return %arg0, %c0_i32 : i32, i32
  }
  func.func @transform_4(%arg0: i32) -> (i32, i32, i32) {
    %c0_i32 = arith.constant 0 : i32
    %c0_i32_0 = arith.constant 0 : i32
    %c0_i32_1 = arith.constant 0 : i32
    %c0_i32_2 = arith.constant 0 : i32
    return %c0_i32, %c0_i32_0, %c0_i32_1 : i32, i32, i32
  }
}

</mosaic_0001>

<llo_original>
// kernel: tpu_custom_call.1
$region0: #{tpu_custom_call.1}
  #allocation0 [shape = 'u32[]', space=smem, size = 0x4, offset = 0x4, fixed_abs, tag = 'smem constant byte address 0x4 - core index']
  #allocation1 [shape = 'u32[72,128]{1,0:T(1,128)}', space=vmem, size = 0x9000, scoped, tag = 'internal scratch']
  #allocation2 [shape = 'f32[1]{0:T(128)S(6)}', space=smem, size = 0x200, scoped, tag = 'scoped memory for tpu_custom_call.1']
  %s0 = inlined_call_operand.<no memory space> [shape: f32[1], index: 0, kind: input, shape index: {}]
  %s1 = inlined_call_operand.hbm [shape: f32[8,128], index: 1, kind: input, shape index: {}]
  %s2 = inlined_call_operand.hbm [shape: s32[8,128], index: 2, kind: input, shape index: {}]
  %s3 = inlined_call_operand.hbm [shape: f32[8,128], index: 3, kind: input, shape index: {}]
  %s4 = inlined_call_operand.hbm [shape: f32[8,8,128], index: 4, kind: output, shape index: {}]
  %s5 = sld [smem:[#allocation0]]
  $region42: #{tpu_custom_call.1} parent=0
    _
  %s7 = ssub.s32 1, %s5
  %s8 = scalar_select 0, %s7, %s5
  %9 = sst [smem:[#allocation2]] %s0
  $region1: #{tpu_custom_call.1} parent=0
    #allocation3 [shape = 'u8[4096]{0}', space=vmem, size = 0x1000, scoped, tag = 'input window, operand 1, single buffered']
    #allocation4 [shape = 's32[1]{0}', space=sflag, size = 0x4, scoped, tag = 'scoped memory for tpu_custom_call.1']
    #allocation5 [shape = 's32[1]{0}', space=sflag, size = 0x4, scoped, tag = 'scoped memory for tpu_custom_call.1']
    #allocation6 [shape = 'u8[4096]{0}', space=vmem, size = 0x1000, scoped, tag = 'input window, operand 2, single buffered']
    #allocation7 [shape = 's32[1]{0}', space=sflag, size = 0x4, scoped, tag = 'scoped memory for tpu_custom_call.1']
    #allocation8 [shape = 'u8[4096]{0}', space=vmem, size = 0x1000, scoped, tag = 'input window, operand 3, single buffered']
    #allocation9 [shape = 'u8[32768]{0}', space=vmem, size = 0x8000, scoped, tag = 'output window, operand 0, single buffered']
    %10 = vsyncpa [#allocation4], 0
    %11 = vsyncpa [#allocation7], 0
    %12 = vsyncpa [#allocation5], 0
    // Predicated region
    $region2: #{tpu_custom_call.1} parent=1 // pred_check
      _
    $region3: #{tpu_custom_call.1} parent=1 // pred_check_branch
      %14 = sbr.rel (0) target = $region5
    $region4: #{tpu_custom_call.1} parent=1 // pred_region
      _
    $region5: #{tpu_custom_call.1} parent=1 // pred_fallthru
      _
    // Predicated region
    $region6: #{tpu_custom_call.1} parent=1 // pred_check
      _
    $region7: #{tpu_custom_call.1} parent=1 // pred_check_branch
      %16 = sbr.rel (0) target = $region9
    $region8: #{tpu_custom_call.1} parent=1 // pred_region
      %18 = vsyncadd [#allocation4], 0
      %s20 = sshll.u32 %s1, 4
      %s21 = int_to_ptr.hbm [resolvable:$true] %s20
      %s22 = sshll.u32 [#allocation3], 4
      %s23 = int_to_ptr.vmem [resolvable:$true] %s22
      %25 = dma.hbm_to_vmem [thread:$0]  %s21, 128, %s23, [#allocation4]
    $region9: #{tpu_custom_call.1} parent=1 // pred_fallthru
      _
    // Predicated region
    $region10: #{tpu_custom_call.1} parent=1 // pred_check
      _
    $region11: #{tpu_custom_call.1} parent=1 // pred_check_branch
      %27 = sbr.rel (0) target = $region13
    $region12: #{tpu_custom_call.1} parent=1 // pred_region
      %29 = vsyncadd [#allocation7], 0
      %s31 = sshll.u32 %s2, 4
      %s32 = int_to_ptr.hbm [resolvable:$true] %s31
      %s33 = sshll.u32 [#allocation6], 4
      %s34 = int_to_ptr.vmem [resolvable:$true] %s33
      %36 = dma.hbm_to_vmem [thread:$0]  %s32, 128, %s34, [#allocation7]
    $region13: #{tpu_custom_call.1} parent=1 // pred_fallthru
      _
    // Predicated region
    $region14: #{tpu_custom_call.1} parent=1 // pred_check
      _
    $region15: #{tpu_custom_call.1} parent=1 // pred_check_branch
      %38 = sbr.rel (0) target = $region17
    $region16: #{tpu_custom_call.1} parent=1 // pred_region
      %40 = vsyncadd [#allocation7], 0
      %s42 = sshll.u32 %s3, 4
      %s43 = int_to_ptr.hbm [resolvable:$true] %s42
      %s44 = sshll.u32 [#allocation8], 4
      %s45 = int_to_ptr.vmem [resolvable:$true] %s44
      %47 = dma.hbm_to_vmem [thread:$0]  %s43, 128, %s45, [#allocation7]
    $region17: #{tpu_custom_call.1} parent=1 // pred_fallthru
      _
    // Predicated region
    $region18: #{tpu_custom_call.1} parent=1 // pred_check
      _
    $region19: #{tpu_custom_call.1} parent=1 // pred_check_branch
      %49 = sbr.rel (0) target = $region21
    $region20: #{tpu_custom_call.1} parent=1 // pred_region
      %51 = dma.done [#allocation4], 128
    $region21: #{tpu_custom_call.1} parent=1 // pred_fallthru
      _
    // Predicated region
    $region22: #{tpu_custom_call.1} parent=1 // pred_check
      _
    $region23: #{tpu_custom_call.1} parent=1 // pred_check_branch
      %53 = sbr.rel (0) target = $region25
    $region24: #{tpu_custom_call.1} parent=1 // pred_region
      %55 = dma.done [#allocation7], 128
    $region25: #{tpu_custom_call.1} parent=1 // pred_fallthru
      _
    // Predicated region
    $region26: #{tpu_custom_call.1} parent=1 // pred_check
      _
    $region27: #{tpu_custom_call.1} parent=1 // pred_check_branch
      %57 = sbr.rel (0) target = $region29
    $region28: #{tpu_custom_call.1} parent=1 // pred_region
      %59 = dma.done [#allocation7], 128
    $region29: #{tpu_custom_call.1} parent=1 // pred_fallthru
      _
    %p60 = scmp.eq.s32.totalorder 0, 0
    // Predicated region
    $region30: #{tpu_custom_call.1} parent=1 // pred_check
      %p61 = pneg %p60
    $region31: #{tpu_custom_call.1} parent=1 // pred_check_branch
      %63 = sbr.rel (%p61) target = $region33
    $region32: #{tpu_custom_call.1} parent=1 // pred_region
      %64 = vst [vmem:[#allocation9] sm:$0xff] 0.0
      %65 = vst [vmem:[#allocation9 + $0x8] sm:$0xff] 0.0
      %66 = vst [vmem:[#allocation9 + $0x10] sm:$0xff] 0.0
      %67 = vst [vmem:[#allocation9 + $0x18] sm:$0xff] 0.0
      %68 = vst [vmem:[#allocation9 + $0x20] sm:$0xff] 0.0
      %69 = vst [vmem:[#allocation9 + $0x28] sm:$0xff] 0.0
      %70 = vst [vmem:[#allocation9 + $0x30] sm:$0xff] 0.0
      %71 = vst [vmem:[#allocation9 + $0x38] sm:$0xff] 0.0
    $region33: #{tpu_custom_call.1} parent=1 // pred_fallthru
      _
    %v72 = vld [vmem:[#allocation3] sm:$0xff]
    %v73 = vld [vmem:[#allocation6] sm:$0xff]
    %v74 = vld [vmem:[#allocation8] sm:$0xff]
    %s75 = sld [smem:[#allocation2]]
    %v76 = vstv %s75
    %v77 = vsub.f32 %v72, %v76
    %v78 = vmul.f32 %v77, 2.5
    %v79 = vsub.f32 0.0, %v78
    %v80 = vmul.f32 %v79, 1.442695
    %v81 = vpow.pop %v80
    %v82 = vadd.f32 %v81, 1.0
    %v83 = vrcp.pop %v82
    %v84 = vmul.f32 %v82, %v83
    %v85 = vsub.f32 1.0, %v84
    %v86 = vmul.f32 %v83, %v85
    %v87 = vadd.f32 %v83, %v86
    %vm88 = vweird.f32 %v82
    %vm89 = vweird.f32 %v83
    %vm90 = vmor %vm88, %vm89
    %v91 = vsel %vm90, %v83, %v87
    %v92 = vand.u32 2147483647, %v82
    %vm93 = vcmp.eq.f32.partialorder %v92, 8.507059e+37
    %v94 = vand.u32 %v82, 2147483648
    %v95 = vor.u32 1.1754944e-38, %v94
    %v96 = vsel %vm93, %v95, %v91
    %v97 = vmul.f32 1.0, %v96
    %v98 = vmax.f32 %v97, 0.001
    %v99 = vmin.f32 %v98, 0.999
    %v100 = vmul.f32 %v74, %v99
    %s101 = scalar_lea.vmem [#allocation9], 48
    %v102 = vld [vmem:[%s101] sm:$0xff]
    %v103 = vadd.f32 %v102, %v100
    %104 = vst [vmem:[%s101] sm:$0xff] %v103
    %s105 = scalar_lea.vmem [#allocation9], 56
    %v106 = vld [vmem:[%s105] sm:$0xff]
    %v107 = vadd.f32 %v106, %v74
    %108 = vst [vmem:[%s105] sm:$0xff] %v107
    %vm109 = vcmp.eq.s32.totalorder %v73, 0
    %v110 = vsel %vm109, 1, 0
    %v111 = vcvt.s32.f32 %v110
    %v112 = vld [vmem:[#allocation9] sm:$0xff]
    %v113 = vmul.f32 %v100, %v111
    %v114 = vadd.f32 %v112, %v113
    %115 = vst [vmem:[#allocation9] sm:$0xff] %v114
    %s116 = scalar_lea.vmem [#allocation9], 24
    %v117 = vld [vmem:[%s116] sm:$0xff]
    %v118 = vmul.f32 %v74, %v111
    %v119 = vadd.f32 %v117, %v118
    %120 = vst [vmem:[%s116] sm:$0xff] %v119
    %vm121 = vcmp.eq.s32.totalorder %v73, 1
    %v122 = vsel %vm121, 1, 0
    %v123 = vcvt.s32.f32 %v122
    %s124 = scalar_lea.vmem [#allocation9], 8
    %v125 = vld [vmem:[%s124] sm:$0xff]
    %v126 = vmul.f32 %v100, %v123
    %v127 = vadd.f32 %v125, %v126
    %128 = vst [vmem:[%s124] sm:$0xff] %v127
    %s129 = scalar_lea.vmem [#allocation9], 32
    %v130 = vld [vmem:[%s129] sm:$0xff]
    %v131 = vmul.f32 %v74, %v123
    %v132 = vadd.f32 %v130, %v131
    %133 = vst [vmem:[%s129] sm:$0xff] %v132
    %vm134 = vcmp.eq.s32.totalorder %v73, 2
    %v135 = vsel %vm134, 1, 0
    %v136 = vcvt.s32.f32 %v135
    %s137 = scalar_lea.vmem [#allocation9], 16
    %v138 = vld [vmem:[%s137] sm:$0xff]
    %v139 = vmul.f32 %v100, %v136
    %v140 = vadd.f32 %v138, %v139
    %141 = vst [vmem:[%s137] sm:$0xff] %v140
    %s142 = scalar_lea.vmem [#allocation9], 40
    %v143 = vld [vmem:[%s142] sm:$0xff]
    %v144 = vmul.f32 %v74, %v136
    %v145 = vadd.f32 %v143, %v144
    %146 = vst [vmem:[%s142] sm:$0xff] %v145
    // Predicated region
    $region34: #{tpu_custom_call.1} parent=1 // pred_check
      _
    $region35: #{tpu_custom_call.1} parent=1 // pred_check_branch
      %148 = sbr.rel (0) target = $region37
    $region36: #{tpu_custom_call.1} parent=1 // pred_region
      %150 = vsyncadd [#allocation5], 0
      %s151 = sshll.u32 [#allocation9], 4
      %s152 = int_to_ptr.vmem [resolvable:$true] %s151
      %s153 = sshll.u32 %s4, 4
      %s154 = int_to_ptr.hbm [resolvable:$true] %s153
      %159 = dma.vmem_to_hbm [thread:$0]  %s152, 1024, %s154, [#allocation5], 128, 128, 8
    $region37: #{tpu_custom_call.1} parent=1 // pred_fallthru
      _
    // Predicated region
    $region38: #{tpu_custom_call.1} parent=1 // pred_check
      _
    $region39: #{tpu_custom_call.1} parent=1 // pred_check_branch
      %161 = sbr.rel (0) target = $region41
    $region40: #{tpu_custom_call.1} parent=1 // pred_region
      %163 = dma.done [#allocation5], 1024
    $region41: #{tpu_custom_call.1} parent=1 // pred_fallthru
      _
    %164 = vsyncpa [#allocation4], 1
    %165 = vsyncpa [#allocation7], 1
    %166 = vsyncpa [#allocation5], 1

</llo_original>
